<compile_context>
chip_gen: v7x
topology: tpu7x:2x2x1
jax: 0.10.0
libtpu: 0.0.40
codegen_flags: <defaults>
</compile_context>

<pallas_src>
import functools

import jax
import jax.numpy as jnp
from jax import lax
from jax.experimental import pallas as pl
from jax.experimental.pallas import tpu as pltpu

_MIB = 1024 * 1024


def _pick_tile(dim, prefs):
    """Largest preferred tile (descending prefs) that evenly divides `dim`, else None."""
    for p in prefs:
        if dim >= p and dim % p == 0:
            return p
    return None


def _vmem_limit(estimate_bytes):
    """Explicit scoped-VMEM budget: >= the 32 MiB default, capped at 48 MiB for v7x."""
    return int(min(max(2 * estimate_bytes, 32 * _MIB), 48 * _MIB))


# ----------------------------------------------------------------------------
# Tiled dense linear:  y = x @ W (+ b),  W stored as (in, out)
# ----------------------------------------------------------------------------
def _linear_kernel(x_ref, w_ref, o_ref, acc_ref):
    @pl.when(pl.program_id(2) == 0)
    def _():
        acc_ref[...] = jnp.zeros_like(acc_ref)

    acc_ref[...] += jnp.dot(x_ref[...], w_ref[...],
                            preferred_element_type=jnp.float32)

    @pl.when(pl.program_id(2) == pl.num_programs(2) - 1)
    def _():
        o_ref[...] = acc_ref[...].astype(o_ref.dtype)


def _linear_bias_kernel(x_ref, w_ref, b_ref, o_ref, acc_ref):
    @pl.when(pl.program_id(2) == 0)
    def _():
        acc_ref[...] = jnp.zeros_like(acc_ref)

    acc_ref[...] += jnp.dot(x_ref[...], w_ref[...],
                            preferred_element_type=jnp.float32)

    @pl.when(pl.program_id(2) == pl.num_programs(2) - 1)
    def _():
        o_ref[...] = (acc_ref[...] + b_ref[...].astype(jnp.float32)).astype(o_ref.dtype)


def pallas_linear(x2d, w, b=None):
    """x2d: (M, K), w: (K, N), optional b: (N,) -> (M, N) in x2d.dtype."""
    M, K = x2d.shape
    K2, N = w.shape
    assert K == K2

    # Row tiling: never fall back to an untiled full-extent block for large M —
    # pad M up to a tile multiple instead (keeps pipelining + bounded VMEM).
    tm = _pick_tile(M, (512, 256, 128, 64, 32, 16, 8))
    pad_m = 0
    if tm is None:
        if M > 512:
            tm = 256
            pad_m = (-M) % tm
            x2d = jnp.pad(x2d, ((0, pad_m), (0, 0)))
        else:
            tm = M
    Mp = M + pad_m
    tn = _pick_tile(N, (512, 256, 128)) or N   # C / 2C are usually 128-multiples
    tk = _pick_tile(K, (512, 256, 128)) or K
    grid = (Mp // tm, N // tn, K // tk)

    in_specs = [
        pl.BlockSpec((tm, tk), lambda i, j, k: (i, k)),
        pl.BlockSpec((tk, tn), lambda i, j, k: (k, j)),
    ]
    args = [x2d, w]
    if b is not None:
        in_specs.append(pl.BlockSpec((1, tn), lambda i, j, k: (0, j)))
        args.append(b.reshape(1, N))
        kernel = _linear_bias_kernel
    else:
        kernel = _linear_kernel

    itemsize = jnp.dtype(x2d.dtype).itemsize
    est = (2 * (tm * tk + tk * tn + tm * tn) * itemsize   # double-buffered x/w/out
           + tm * tn * 4                                  # f32 accumulator
           + (2 * tn * 4 if b is not None else 0))

    out = pl.pallas_call(
        kernel,
        out_shape=jax.ShapeDtypeStruct((Mp, N), x2d.dtype),
        grid_spec=pltpu.PrefetchScalarGridSpec(
            num_scalar_prefetch=0,
            grid=grid,
            in_specs=in_specs,
            out_specs=pl.BlockSpec((tm, tn), lambda i, j, k: (i, j)),
            scratch_shapes=[pltpu.VMEM((tm, tn), jnp.float32)],
        ),
        compiler_params=pltpu.CompilerParams(
            dimension_semantics=("parallel", "parallel", "arbitrary"),
            vmem_limit_bytes=_vmem_limit(est)),
    )(*args)
    return out[:M] if pad_m else out


# ----------------------------------------------------------------------------
# Flash-style cross attention (online softmax over L tiles).
#   q_proj : (B, N, C)    -- q linear output, NOT transposed (softmax scale pre-folded)
#   kv_proj: (B, L, 2C)   -- kv linear output; columns [0,C)=k, [C,2C)=v per head
#   out    : (B, N, C)    -- lane-dense, already in the layout the output proj needs
# Grid: (B, N//TILE_N, L//TILE_L), L innermost ("arbitrary").
# Scratch (persist across the L axis): per-head running max / sum / f32 accumulator.
# ----------------------------------------------------------------------------
def _pick_head_group(num_heads, head_dim):
    """Smallest head-group size whose column width is a 128-lane multiple; else all
    heads in one group (a single full-block-width store, still unmasked)."""
    for g in range(1, num_heads + 1):
        if num_heads % g == 0 and (g * head_dim) % 128 == 0:
            return g
    return num_heads


def _flash_attn_kernel(q_ref, kv_ref, o_ref, m_sc, l_sc, acc_sc,
                       *, num_heads, head_dim, heads_per_group):
    l_idx = pl.program_id(2)
    C = num_heads * head_dim

    @pl.when(l_idx == 0)
    def _():
        m_sc[...] = jnp.full_like(m_sc, -jnp.inf)
        l_sc[...] = jnp.zeros_like(l_sc)
        acc_sc[...] = jnp.zeros_like(acc_sc)

    q = q_ref[0]      # (TILE_N, C)   input dtype (bf16 path feeds MXU natively)
    kv = kv_ref[0]    # (TILE_L, 2C)

    for h in range(num_heads):                     # static unrolled head loop
        lo = h * head_dim
        hi = lo + head_dim
        qh = q[:, lo:hi]                           # scale already folded into wq
        kh = kv[:, lo:hi]                          # (TILE_L, D)
        vh = kv[:, C + lo:C + hi]                  # (TILE_L, D)

        # q @ k^T without materializing a transposed copy of k; f32 accumulation.
        s = lax.dot_general(qh, kh, (((1,), (1,)), ((), ())),
                            preferred_element_type=jnp.float32)   # (TILE_N, TILE_L)

        m_prev = m_sc[h]                                          # (TILE_N, 1) f32
        m_new = jnp.maximum(m_prev, jnp.max(s, axis=-1, keepdims=True))
        alpha = jnp.exp(m_prev - m_new)
        p = jnp.exp(s - m_new)                                    # f32 probabilities
        l_sc[h] = alpha * l_sc[h] + jnp.sum(p, axis=-1, keepdims=True)
        acc_sc[h] = alpha * acc_sc[h] + jnp.dot(p.astype(vh.dtype), vh,
                                                preferred_element_type=jnp.float32)
        m_sc[h] = m_new

    @pl.when(l_idx == pl.num_programs(2) - 1)
    def _():
        # Normalize and store per 128-lane-aligned head group (direct lane-dense store).
        for g0 in range(0, num_heads, heads_per_group):
            g1 = min(g0 + heads_per_group, num_heads)
            cols = [acc_sc[h] * pl.reciprocal(l_sc[h], approx=False)
                    for h in range(g0, g1)]
            grp = cols[0] if len(cols) == 1 else jnp.concatenate(cols, axis=-1)
            o_ref[0, :, g0 * head_dim:g1 * head_dim] = grp.astype(o_ref.dtype)


def pallas_cross_attention(q_bnc, kv_bl2c, num_heads):
    B, N, C = q_bnc.shape
    _, L, C2 = kv_bl2c.shape
    D = C // num_heads
    assert num_heads * D == C and C2 == 2 * C

    tile_n = _pick_tile(N, (256, 128)) or N         # >=256 preferred (MXU fill/drain)
    tile_l = _pick_tile(L, (512, 256, 128)) or L    # bounds kv block + f32 logits
    hpg = _pick_head_group(num_heads, D)
    grid = (B, N // tile_n, L // tile_l)

    itemsize = jnp.dtype(q_bnc.dtype).itemsize
    est = (2 * (tile_n * C + tile_l * C2 + tile_n * C) * itemsize  # dbl-buffered q/kv/out
           + num_heads * tile_n * (D + 2) * 4                      # f32 scratch
           + 2 * tile_n * tile_l * 4)                              # transient f32 s/p

    kern = functools.partial(_flash_attn_kernel, num_heads=num_heads,
                             head_dim=D, heads_per_group=hpg)
    return pl.pallas_call(
        kern,
        out_shape=jax.ShapeDtypeStruct((B, N, C), q_bnc.dtype),
        grid_spec=pltpu.PrefetchScalarGridSpec(
            num_scalar_prefetch=0,
            grid=grid,
            in_specs=[
                pl.BlockSpec((1, tile_n, C), lambda b, n, l: (b, n, 0)),
                pl.BlockSpec((1, tile_l, C2), lambda b, n, l: (b, l, 0)),
            ],
            out_specs=pl.BlockSpec((1, tile_n, C), lambda b, n, l: (b, n, 0)),
            scratch_shapes=[
                pltpu.VMEM((num_heads, tile_n, 1), jnp.float32),   # running max
                pltpu.VMEM((num_heads, tile_n, 1), jnp.float32),   # running sum
                pltpu.VMEM((num_heads, tile_n, D), jnp.float32),   # output accumulator
            ],
        ),
        compiler_params=pltpu.CompilerParams(
            dimension_semantics=("parallel", "parallel", "arbitrary"),
            vmem_limit_bytes=_vmem_limit(est)),
    )(q_bnc, kv_bl2c)


# ----------------------------------------------------------------------------
# Module wrapper: no transposes, only free reshapes between pallas_calls.
# compute_dtype=jnp.bfloat16 feeds the MXU bf16 operands (f32 accumulation) and
# halves HBM bytes for the (B,N,C)/(B,L,2C) intermediates.
# ----------------------------------------------------------------------------
def m2p_attention(x, m, params, num_heads, *, compute_dtype=None):
    B, N, C = x.shape
    _, L, _ = m.shape
    D = C // num_heads
    assert num_heads * D == C, "num_heads must divide dim"
    scale = D ** (-0.5)
    cd = compute_dtype or x.dtype

    # Fold the softmax scale into wq once (free weight transform, removes the
    # per-head per-tile multiply inside the attention kernel).
    wq = (params["wq"] * scale).astype(cd)
    wkv = params["wkv"].astype(cd)
    wproj = params["wproj"].astype(cd)
    bproj = params["bproj"].astype(jnp.float32)   # bias added on the f32 accumulator
    xin = x.astype(cd)
    min_ = m.astype(cd)

    # q / kv projections (qkv_bias=False -> biasless kernel, no zero-bias DMA)
    q = pallas_linear(xin.reshape(B * N, C), wq).reshape(B, N, C)
    kv = pallas_linear(min_.reshape(B * L, C), wkv).reshape(B, L, 2 * C)

    # flash-style head-fused attention, output already (B, N, C) lane-dense
    o = pallas_cross_attention(q, kv, num_heads)

    # output projection (has bias)
    o = pallas_linear(o.reshape(B * N, C), wproj, bproj)
    return o.reshape(B, N, C)


# ----------------------------------------------------------------------------
# Pure-JAX reference (mirrors the PyTorch forward) for correctness check
# ----------------------------------------------------------------------------
def m2p_attention_ref(x, m, params, num_heads):
    B, N, C = x.shape
    _, L, _ = m.shape
    H, D = num_heads, C // num_heads
    scale = D ** (-0.5)
    q = (x @ params["wq"]).reshape(B, N, H, D).transpose(0, 2, 1, 3)
    kv = (m @ params["wkv"]).reshape(B, L, 2, H, D).transpose(2, 0, 3, 1, 4)
    k, v = kv[0], kv[1]
    attn = jnp.einsum("bhnd,bhld->bhnl", q, k) * scale
    attn = jax.nn.softmax(attn, axis=-1)
    o = jnp.einsum("bhnl,bhld->bhnd", attn, v)
    o = o.transpose(0, 2, 1, 3).reshape(B, N, C)
    return o @ params["wproj"] + params["bproj"]


if __name__ == "__main__":
    # small shapes consistent with the module
    B, N, L, C, H = 2, 8, 16, 32, 4

    key = jax.random.PRNGKey(0)
    k_x, k_m, k_wq, k_wkv, k_wp, k_bp = jax.random.split(key, 6)

    x = jax.random.normal(k_x, (B, N, C), dtype=jnp.float32)
    m = jax.random.normal(k_m, (B, L, C), dtype=jnp.float32)

    # deterministic parameter init (weights stored as (in, out); qkv_bias=False)
    params = {
        "wq":    0.05 * jax.random.normal(k_wq,  (C, C),     dtype=jnp.float32),
        "wkv":   0.05 * jax.random.normal(k_wkv, (C, 2 * C), dtype=jnp.float32),
        "wproj": 0.05 * jax.random.normal(k_wp,  (C, C),     dtype=jnp.float32),
        "bproj": 0.01 * jax.random.normal(k_bp,  (C,),       dtype=jnp.float32),
    }

    ref = m2p_attention_ref(x, m, params, num_heads=H)

    # f32 path: exact reciprocal + online softmax -> tight match
    out = jax.block_until_ready(m2p_attention(x, m, params, num_heads=H))
    assert out.shape == (B, N, C)
    assert jnp.allclose(out, ref, rtol=1e-2, atol=1e-2), "f32 mismatch vs reference"

    # bf16 compute path (native MXU rate, bf16 intermediates): looser tolerance
    out_bf16 = jax.block_until_ready(
        m2p_attention(x, m, params, num_heads=H, compute_dtype=jnp.bfloat16))
    err = jnp.max(jnp.abs(out_bf16.astype(jnp.float32) - ref))
    assert out_bf16.shape == (B, N, C)
    assert err < 5e-2, f"bf16 mismatch vs reference (max abs err {err})"

    print("KERNEL_OK")
</pallas_src>

<mosaic_0001>
module attributes {stable_mosaic.version = 11 : i64} {
  func.func @_linear_kernel(%arg0: i32, %arg1: i32, %arg2: i32, %arg3: memref<16x32xf32, #tpu.memory_space<vmem>>, %arg4: memref<32x32xf32, #tpu.memory_space<vmem>>, %arg5: memref<16x32xf32, #tpu.memory_space<vmem>>, %arg6: memref<16x32xf32, #tpu.memory_space<vmem>>) attributes {dimension_semantics = [#tpu.dimension_semantics<parallel>, #tpu.dimension_semantics<parallel>, #tpu.dimension_semantics<arbitrary>], iteration_bounds = array<i64: 1, 1, 1>, scalar_prefetch = 0 : i64, scratch_operands = 1 : i64, tpu.core_type = #tpu.core_type<tc>, window_params = [{transform_indices = @transform_0, window_bounds = array<i64: 16, 32>}, {transform_indices = @transform_1, window_bounds = array<i64: 32, 32>}, {transform_indices = @transform_2, window_bounds = array<i64: 16, 32>}]} {
    %c0_i32 = arith.constant 0 : i32
    %0 = arith.cmpi eq, %arg2, %c0_i32 : i32
    %1 = arith.extui %0 : i1 to i32
    %c0_i32_0 = arith.constant 0 : i32
    %2 = arith.cmpi ne, %1, %c0_i32_0 : i32
    scf.if %2 {
      %cst_10 = arith.constant 0.000000e+00 : f32
      %12 = vector.broadcast %cst_10 : f32 to vector<16x32xf32>
      %c0_11 = arith.constant 0 : index
      %c0_12 = arith.constant 0 : index
      %13 = vector.load %arg6[%c0_11, %c0_12] : memref<16x32xf32, #tpu.memory_space<vmem>>, vector<16x32xf32>
      tpu.vector_store %arg6[%c0_11, %c0_12], %12 {strides = array<i32>} : memref<16x32xf32, #tpu.memory_space<vmem>>, vector<16x32xf32>,
    } else {
    }
    %c0 = arith.constant 0 : index
    %c0_1 = arith.constant 0 : index
    %3 = vector.load %arg6[%c0, %c0_1] : memref<16x32xf32, #tpu.memory_space<vmem>>, vector<16x32xf32>
    %c0_2 = arith.constant 0 : index
    %c0_3 = arith.constant 0 : index
    %4 = vector.load %arg3[%c0_2, %c0_3] : memref<16x32xf32, #tpu.memory_space<vmem>>, vector<16x32xf32>
    %c0_4 = arith.constant 0 : index
    %c0_5 = arith.constant 0 : index
    %5 = vector.load %arg4[%c0_4, %c0_5] : memref<32x32xf32, #tpu.memory_space<vmem>>, vector<32x32xf32>
    %cst = arith.constant dense<0.000000e+00> : vector<16x32xf32>
    %6 = tpu.matmul %4, %5, %cst {dimension_numbers = #tpu.dot_dimension_numbers<[1], [0], [0], [1], [0, 0, 1, 1], [], []>} : vector<16x32xf32>, vector<32x32xf32>, vector<16x32xf32> -> vector<16x32xf32>
    %7 = arith.addf %3, %6 : vector<16x32xf32>
    %c0_6 = arith.constant 0 : index
    %c0_7 = arith.constant 0 : index
    %8 = vector.load %arg6[%c0_6, %c0_7] : memref<16x32xf32, #tpu.memory_space<vmem>>, vector<16x32xf32>
    tpu.vector_store %arg6[%c0_6, %c0_7], %7 {strides = array<i32>} : memref<16x32xf32, #tpu.memory_space<vmem>>, vector<16x32xf32>,
    %c0_i32_8 = arith.constant 0 : i32
    %9 = arith.cmpi eq, %arg2, %c0_i32_8 : i32
    %10 = arith.extui %9 : i1 to i32
    %c0_i32_9 = arith.constant 0 : i32
    %11 = arith.cmpi ne, %10, %c0_i32_9 : i32
    scf.if %11 {
      %c0_10 = arith.constant 0 : index
      %c0_11 = arith.constant 0 : index
      %12 = vector.load %arg6[%c0_10, %c0_11] : memref<16x32xf32, #tpu.memory_space<vmem>>, vector<16x32xf32>
      %c0_12 = arith.constant 0 : index
      %c0_13 = arith.constant 0 : index
      %13 = vector.load %arg5[%c0_12, %c0_13] : memref<16x32xf32, #tpu.memory_space<vmem>>, vector<16x32xf32>
      tpu.vector_store %arg5[%c0_12, %c0_13], %12 {strides = array<i32>} : memref<16x32xf32, #tpu.memory_space<vmem>>, vector<16x32xf32>,
    } else {
    }
    return
  }
  func.func @transform_0(%arg0: i32, %arg1: i32, %arg2: i32) -> (i32, i32) {
    %c0_i32 = arith.constant 0 : i32
    return %arg0, %arg2 : i32, i32
  }
  func.func @transform_1(%arg0: i32, %arg1: i32, %arg2: i32) -> (i32, i32) {
    %c0_i32 = arith.constant 0 : i32
    return %arg2, %arg1 : i32, i32
  }
  func.func @transform_2(%arg0: i32, %arg1: i32, %arg2: i32) -> (i32, i32) {
    %c0_i32 = arith.constant 0 : i32
    return %arg0, %arg1 : i32, i32
  }
}

</mosaic_0001>

<llo_original>
// kernel: tpu_custom_call.1
$region0: #{tpu_custom_call.1}
  #allocation0 [shape = 'u32[]', space=smem, size = 0x4, offset = 0x4, fixed_abs, tag = 'smem constant byte address 0x4 - core index']
  #allocation1 [shape = 'u32[144,128]{1,0:T(1,128)}', space=vmem, size = 0x12000, scoped, tag = 'internal scratch']
  #allocation2 [shape = 'f32[16,32]{1,0:T(8,128)}', space=vmem, size = 0x2000, scoped, tag = 'scratch operand']
  %s0 = inlined_call_operand.hbm [shape: f32[16,32], index: 0, kind: input, shape index: {}]
  %s1 = inlined_call_operand.hbm [shape: f32[32,32], index: 1, kind: input, shape index: {}]
  %s2 = inlined_call_operand.hbm [shape: f32[16,32], index: 2, kind: output, shape index: {}]
  %s3 = sld [smem:[#allocation0]]
  $region34: #{tpu_custom_call.1} parent=0
    _
  %s5 = ssub.s32 1, %s3
  %s6 = scalar_select 0, %s5, %s3
  $region1: #{tpu_custom_call.1} parent=0
    #allocation3 [shape = 'u8[8192]{0}', space=vmem, size = 0x2000, scoped, tag = 'input window, operand 0, single buffered']
    #allocation4 [shape = 's32[1]{0}', space=sflag, size = 0x4, scoped, tag = 'scoped memory for tpu_custom_call.1']
    #allocation5 [shape = 's32[1]{0}', space=sflag, size = 0x4, scoped, tag = 'scoped memory for tpu_custom_call.1']
    #allocation6 [shape = 'u8[16384]{0}', space=vmem, size = 0x4000, scoped, tag = 'input window, operand 1, single buffered']
    #allocation7 [shape = 's32[1]{0}', space=sflag, size = 0x4, scoped, tag = 'scoped memory for tpu_custom_call.1']
    #allocation8 [shape = 'u8[8192]{0}', space=vmem, size = 0x2000, scoped, tag = 'output window, operand 0, single buffered']
    %7 = vsyncpa [#allocation4], 0
    %8 = vsyncpa [#allocation7], 0
    %9 = vsyncpa [#allocation5], 0
    // Predicated region
    $region2: #{tpu_custom_call.1} parent=1 // pred_check
      _
    $region3: #{tpu_custom_call.1} parent=1 // pred_check_branch
      %11 = sbr.rel (0) target = $region5
    $region4: #{tpu_custom_call.1} parent=1 // pred_region
      %s13 = ssub.s32 256, 256
      %14 = vsyncadd [#allocation4], %s13
      %s15 = sshll.u32 [#allocation3], 4
      %s16 = int_to_ptr.vmem [resolvable:$true] %s15
      %21 = dma.hbm_to_vmem [thread:$0]  %s0, 256, %s16, [#allocation4], 128, 128, 8
    $region5: #{tpu_custom_call.1} parent=1 // pred_fallthru
      _
    // Predicated region
    $region6: #{tpu_custom_call.1} parent=1 // pred_check
      _
    $region7: #{tpu_custom_call.1} parent=1 // pred_check_branch
      %23 = sbr.rel (0) target = $region9
    $region8: #{tpu_custom_call.1} parent=1 // pred_region
      %s25 = ssub.s32 512, 512
      %26 = vsyncadd [#allocation7], %s25
      %s27 = sshll.u32 [#allocation6], 4
      %s28 = int_to_ptr.vmem [resolvable:$true] %s27
      %33 = dma.hbm_to_vmem [thread:$0]  %s1, 512, %s28, [#allocation7], 128, 128, 8
    $region9: #{tpu_custom_call.1} parent=1 // pred_fallthru
      _
    // Predicated region
    $region10: #{tpu_custom_call.1} parent=1 // pred_check
      _
    $region11: #{tpu_custom_call.1} parent=1 // pred_check_branch
      %35 = sbr.rel (0) target = $region13
    $region12: #{tpu_custom_call.1} parent=1 // pred_region
      %36 = dma.done [#allocation4], 256
    $region13: #{tpu_custom_call.1} parent=1 // pred_fallthru
      _
    // Predicated region
    $region14: #{tpu_custom_call.1} parent=1 // pred_check
      _
    $region15: #{tpu_custom_call.1} parent=1 // pred_check_branch
      %38 = sbr.rel (0) target = $region17
    $region16: #{tpu_custom_call.1} parent=1 // pred_region
      %39 = dma.done [#allocation7], 512
    $region17: #{tpu_custom_call.1} parent=1 // pred_fallthru
      _
    %p40 = scmp.eq.s32.totalorder 0, 0
    // Predicated region
    $region18: #{tpu_custom_call.1} parent=1 // pred_check
      %p41 = pneg %p40
    $region19: #{tpu_custom_call.1} parent=1 // pred_check_branch
      %43 = sbr.rel (%p41) target = $region21
    $region20: #{tpu_custom_call.1} parent=1 // pred_region
      %vm44 = vcmask 261120
      %45 = vst.msk [vmem:[#allocation2] sm:$0xff] %vm44, 0.0
      %46 = vst.msk [vmem:[#allocation2 + $0x8] sm:$0xff] %vm44, 0.0
    $region21: #{tpu_custom_call.1} parent=1 // pred_fallthru
      _
    %v47 = vld [vmem:[#allocation2] sm:$0xff]
    %v48 = vld [vmem:[#allocation2 + $0x8] sm:$0xff]
    %v49 = vld [vmem:[#allocation3] sm:$0xff]
    %v50 = vld [vmem:[#allocation3 + $0x8] sm:$0xff]
    %v51 = vld [vmem:[#allocation6] sm:$0xff]
    %v52 = vld [vmem:[#allocation6 + $0x8] sm:$0xff]
    %v53 = vld [vmem:[#allocation6 + $0x10] sm:$0xff]
    %v54 = vld [vmem:[#allocation6 + $0x18] sm:$0xff]
    %vm55 = vcmask 261120
    %v57 = vsel %vm55, %v49, 0
    %v60 = vsel %vm55, %v50, 0
    %62 = vmatprep.subr.mxu0 0.0
    %63 = vmatpush1.msra.mxu0 %v51
    %64 = vmatprep.subr.mxu0 0.0
    %65 = vmatpush1.msra.mxu0 %v52
    %66 = vmatprep.subr.mxu0 0.0
    %67 = vmatpush1.msra.mxu0 %v53
    %68 = vmatprep.subr.mxu0 0.0
    %69 = vmatpush1.msra.mxu0 %v54
    %70 = vmatprep.subr.mxu0 0.0
    %71 = vmatpush1.msra.mxu0 0.0
    %72 = vmatprep.subr.mxu0 0.0
    %73 = vmatpush1.msra.mxu0 0.0
    %74 = vmatprep.subr.mxu0 0.0
    %75 = vmatpush1.msra.mxu0 0.0
    %76 = vmatprep.subr.mxu0 0.0
    %77 = vmatpush1.msra.mxu0 0.0
    %78 = vmatprep.subr.mxu0 0.0
    %79 = vmatpush1.msra.mxu0 0.0
    %80 = vmatprep.subr.mxu0 0.0
    %81 = vmatpush1.msra.mxu0 0.0
    %82 = vmatprep.subr.mxu0 0.0
    %83 = vmatpush1.msra.mxu0 0.0
    %84 = vmatprep.subr.mxu0 0.0
    %85 = vmatpush1.msra.mxu0 0.0
    %86 = vmatprep.subr.mxu0 0.0
    %87 = vmatpush1.msra.mxu0 0.0
    %88 = vmatprep.subr.mxu0 0.0
    %89 = vmatpush1.msra.mxu0 0.0
    %90 = vmatprep.subr.mxu0 0.0
    %91 = vmatpush1.msra.mxu0 0.0
    %92 = vmatprep.subr.mxu0 0.0
    %93 = vmatpush1.msra.mxu0 0.0
    %94 = vmatprep.subr.mxu0 0.0
    %95 = vmatpush1.msra.mxu0 0.0
    %96 = vmatprep.subr.mxu0 0.0
    %97 = vmatpush1.msra.mxu0 0.0
    %98 = vmatprep.subr.mxu0 0.0
    %99 = vmatpush1.msra.mxu0 0.0
    %100 = vmatprep.subr.mxu0 0.0
    %101 = vmatpush1.msra.mxu0 0.0
    %102 = vmatprep.subr.mxu0 0.0
    %103 = vmatpush1.msra.mxu0 0.0
    %104 = vmatprep.subr.mxu0 0.0
    %105 = vmatpush1.msra.mxu0 0.0
    %106 = vmatprep.subr.mxu0 0.0
    %107 = vmatpush1.msra.mxu0 0.0
    %108 = vmatprep.subr.mxu0 0.0
    %109 = vmatpush1.msra.mxu0 0.0
    %110 = vmatprep.subr.mxu0 0.0
    %111 = vmatpush1.msra.mxu0 0.0
    %112 = vmatprep.subr.mxu0 0.0
    %113 = vmatpush1.msra.mxu0 0.0
    %114 = vmatprep.subr.mxu0 0.0
    %115 = vmatpush1.msra.mxu0 0.0
    %116 = vmatprep.subr.mxu0 0.0
    %117 = vmatpush1.msra.mxu0 0.0
    %118 = vmatprep.subr.mxu0 0.0
    %119 = vmatpush1.msra.mxu0 0.0
    %120 = vmatprep.subr.mxu0 0.0
    %121 = vmatpush1.msra.mxu0 0.0
    %122 = vmatprep.subr.mxu0 0.0
    %123 = vmatpush1.msra.mxu0 0.0
    %124 = vmatprep.subr.mxu0 0.0
    %125 = vmatpush1.msra.mxu0 0.0
    %126 = vmatprep.mubr.f32.mxu0 0.0
    %127 = vmatmul.mubr.f32.gmra.mrb[0].mxu0 %v57
    %v128 = vpop.f32.mrb[0].mxu0
    %v129 = vadd.f32 0.0, %v128
    %v130 = vpop.f32.mrb[0].mxu0
    %131 = vmatprep.mubr.f32.mxu0 0.0
    %132 = vmatmul.mubr.f32.gmra.mrb[0].mxu0 %v60
    %v133 = vpop.f32.mrb[0].mxu0
    %v134 = vadd.f32 0.0, %v133
    %v135 = vpop.f32.mrb[0].mxu0
    %136 = vdwg.mxu0
    %v137 = vadd.f32 %v47, %v129
    %v138 = vadd.f32 %v48, %v134
    %139 = vst.msk [vmem:[#allocation2] sm:$0xff] %vm55, %v137
    %140 = vst.msk [vmem:[#allocation2 + $0x8] sm:$0xff] %vm55, %v138
    // Predicated region
    $region22: #{tpu_custom_call.1} parent=1 // pred_check
      %p141 = pneg %p40
    $region23: #{tpu_custom_call.1} parent=1 // pred_check_branch
      %143 = sbr.rel (%p141) target = $region25
    $region24: #{tpu_custom_call.1} parent=1 // pred_region
      %v144 = vld [vmem:[#allocation2] sm:$0xff]
      %v145 = vld [vmem:[#allocation2 + $0x8] sm:$0xff]
      %146 = vst.msk [vmem:[#allocation8] sm:$0xff] %vm55, %v144
      %147 = vst.msk [vmem:[#allocation8 + $0x8] sm:$0xff] %vm55, %v145
    $region25: #{tpu_custom_call.1} parent=1 // pred_fallthru
      _
    // Predicated region
    $region26: #{tpu_custom_call.1} parent=1 // pred_check
      _
    $region27: #{tpu_custom_call.1} parent=1 // pred_check_branch
      %149 = sbr.rel (0) target = $region29
    $region28: #{tpu_custom_call.1} parent=1 // pred_region
      %s151 = ssub.s32 256, 256
      %152 = vsyncadd [#allocation5], %s151
      %s153 = sshll.u32 [#allocation8], 4
      %s154 = int_to_ptr.vmem [resolvable:$true] %s153
      %159 = dma.vmem_to_hbm [thread:$0]  %s154, 256, %s2, [#allocation5], 128, 128, 8
    $region29: #{tpu_custom_call.1} parent=1 // pred_fallthru
      _
    // Predicated region
    $region30: #{tpu_custom_call.1} parent=1 // pred_check
      _
    $region31: #{tpu_custom_call.1} parent=1 // pred_check_branch
      %161 = sbr.rel (0) target = $region33
    $region32: #{tpu_custom_call.1} parent=1 // pred_region
      %162 = dma.done [#allocation5], 256
    $region33: #{tpu_custom_call.1} parent=1 // pred_fallthru
      _
    %163 = vsyncpa [#allocation4], 1
    %164 = vsyncpa [#allocation7], 1
    %165 = vsyncpa [#allocation5], 1

</llo_original>
